<compile_context>
chip_gen: v7x
topology: tpu7x:2x2x1
jax: 0.10.0
libtpu: 0.0.40
codegen_flags: <defaults>
</compile_context>

<pallas_src>
import functools

import jax
import jax.numpy as jnp
from jax import lax
from jax.experimental import pallas as pl
from jax.experimental.pallas import tpu as pltpu

INPUT_SIZE = 20
NUM_CLASSES = 2
LAYER_SIZES = [INPUT_SIZE, 12, 12, 9, 9, 6, 6, NUM_CLASSES]
NUM_LAYERS = len(LAYER_SIZES) - 1

PAD_F = 32            # padded feature width (max layer width 20 -> 32)
ONES_ROW = PAD_F - 1  # activation row pinned to 1.0; carries the folded biases
LANE = 128


def _round_up(n, m):
    return (n + m - 1) // m * m


def mlp_kernel(x_ref, w1_ref, b1_ref, wr_ref, o_ref):
    # x_ref : [TB, 20]            raw input tile (batch-major, as supplied)
    # w1_ref: [32, 20]   bf16     fc1 weight (rows >= 12 are zero)
    # b1_ref: [32, 1]    f32      fc1 bias; b1[ONES_ROW] == 1.0 seeds the ones row
    # wr_ref: [6, 32, 32] bf16    fc2..fc7; bias folded into column ONES_ROW
    # o_ref : [2, TB]    f32      softmax probabilities (feature-major, lane-dense)
    xb = x_ref[...].astype(jnp.bfloat16)                          # [TB, 20]

    # Layer 1 as A.B^T (contract both last dims): y[f, b] = sum_i W1[f, i] * x[b, i].
    # Gives the feature-major [32, TB] layout directly — no transpose, no feature pad.
    y = lax.dot_general(w1_ref[...], xb, (((1,), (1,)), ((), ())),
                        preferred_element_type=jnp.float32)       # [32, TB] f32
    h = jnp.maximum(y + b1_ref[...], 0.0).astype(jnp.bfloat16)    # ReLU; ones row -> 1.0

    # Layers 2..7: bias rides on the MXU via the ones row; bf16 operands, f32 acc.
    for i in range(NUM_LAYERS - 1):
        y = jnp.dot(wr_ref[i], h, preferred_element_type=jnp.float32)
        if i < NUM_LAYERS - 2:
            h = jnp.maximum(y, 0.0).astype(jnp.bfloat16)

    # 2-class softmax, reduction-free:  p1 = 1/(1+exp(z0-z1)), p0 = 1-p1.
    z0 = y[0:1, :]
    z1 = y[1:2, :]
    p1 = 1.0 / (1.0 + jnp.exp(z0 - z1))
    o_ref[0:1, :] = 1.0 - p1          # two direct lane-dense slice stores (no concat)
    o_ref[1:2, :] = p1


def pack_params(params):
    """Pack torch-style (W [out,in], b [out]) pairs into kernel operands.

    Returns (w1 [32,20] bf16, b1 [32,1] f32, w_rest [6,32,32] bf16).
    fc1 is applied as W1 @ x^T with an explicit bias add; b1[ONES_ROW] = 1 creates
    the constant-one activation row.  For fc2..fc7 the bias sits in column
    ONES_ROW and W[i, ONES_ROW, ONES_ROW] = 1 keeps the ones row alive, so
    `W_pad @ h` computes `W @ h + b`.  Padded rows/cols are zero throughout.
    """
    w0, b0 = params[0]
    w0 = jnp.asarray(w0, jnp.float32)
    b0 = jnp.asarray(b0, jnp.float32)
    w1 = jnp.zeros((PAD_F, INPUT_SIZE), jnp.float32).at[: w0.shape[0], :].set(w0)
    b1 = (jnp.zeros((PAD_F, 1), jnp.float32)
          .at[: b0.shape[0], 0].set(b0)
          .at[ONES_ROW, 0].set(1.0))

    w_rest = jnp.zeros((NUM_LAYERS - 1, PAD_F, PAD_F), jnp.float32)
    for i, (w, b) in enumerate(params[1:]):
        w = jnp.asarray(w, jnp.float32)
        b = jnp.asarray(b, jnp.float32)
        out_d, in_d = w.shape
        w_rest = w_rest.at[i, :out_d, :in_d].set(w)
        w_rest = w_rest.at[i, :out_d, ONES_ROW].set(b)
        w_rest = w_rest.at[i, ONES_ROW, ONES_ROW].set(1.0)
    return w1.astype(jnp.bfloat16), b1, w_rest.astype(jnp.bfloat16)


@functools.partial(jax.jit, static_argnames=("block_b",))
def nn_forward(x, w1, b1, w_rest, *, block_b=2048):
    """x: [B, 20] float. (w1, b1, w_rest) from pack_params(). Returns probs [B, 2]."""
    B = x.shape[0]

    # Lane-aligned batch tiling; cap the tile at ~half the batch (when possible)
    # so the grid has >=2 steps and both v7x TensorCores get work.
    b_aligned = _round_up(max(B, 1), LANE)
    tb = min(_round_up(block_b, LANE), b_aligned)
    if b_aligned >= 2 * LANE:
        tb = min(tb, _round_up((b_aligned + 1) // 2, LANE))
    bp = _round_up(B, tb)

    # Only wrapper-side transform: a (usually absent / tiny) zero-pad of the batch dim.
    xin = x if bp == B else jnp.pad(x, ((0, bp - B), (0, 0)))

    out = pl.pallas_call(
        mlp_kernel,
        out_shape=jax.ShapeDtypeStruct((NUM_CLASSES, bp), jnp.float32),
        grid=(bp // tb,),
        in_specs=[
            pl.BlockSpec((tb, INPUT_SIZE), lambda i: (i, 0)),                   # x tiles
            pl.BlockSpec((PAD_F, INPUT_SIZE), lambda i: (0, 0)),                # fc1 W (resident)
            pl.BlockSpec((PAD_F, 1), lambda i: (0, 0)),                         # fc1 b (resident)
            pl.BlockSpec((NUM_LAYERS - 1, PAD_F, PAD_F), lambda i: (0, 0, 0)),  # fc2..7 (resident)
        ],
        out_specs=pl.BlockSpec((NUM_CLASSES, tb), lambda i: (0, i)),
        compiler_params=pltpu.CompilerParams(
            dimension_semantics=("parallel",)),   # shards batch across v7x's 2 TCs
    )(xin, w1, b1, w_rest)

    # Tiny final slice/transpose fuses inside this jit; returns torch-shaped [B, 2].
    return out[:, :B].T


def init_params(key):
    """Deterministic init matching torch.nn.Linear shapes: W [out, in], b [out]."""
    params = []
    for i in range(NUM_LAYERS):
        fan_in, fan_out = LAYER_SIZES[i], LAYER_SIZES[i + 1]
        key, kw, kb = jax.random.split(key, 3)
        bound = 1.0 / (fan_in ** 0.5)
        w = jax.random.uniform(kw, (fan_out, fan_in), jnp.float32, -bound, bound)
        b = jax.random.uniform(kb, (fan_out,), jnp.float32, -bound, bound)
        params.append((w, b))
    return params


def reference_forward(x, params):
    h = jnp.asarray(x, jnp.float32)
    for i, (w, b) in enumerate(params):
        h = h @ w.T + b
        if i < NUM_LAYERS - 1:
            h = jnp.maximum(h, 0.0)
    return jax.nn.softmax(h, axis=1)


if __name__ == "__main__":
    key = jax.random.PRNGKey(0)
    kparams, kx = jax.random.split(key)

    params = init_params(kparams)
    w1, b1, w_rest = pack_params(params)

    # Small batch of binary symptom vectors like the original script's input.
    B = 8
    x = (jax.random.uniform(kx, (B, INPUT_SIZE)) > 0.5).astype(jnp.float32)

    out = nn_forward(x, w1, b1, w_rest, block_b=2048)
    out = jax.block_until_ready(out)

    ref = reference_forward(x, params)
    assert out.shape == (B, NUM_CLASSES)
    # bf16 weights/activations on the MXU: match the f32 reference to ~1e-3 level.
    assert jnp.allclose(out, ref, atol=2e-2, rtol=0.0), "mismatch vs reference"
    assert jnp.allclose(jnp.sum(out, axis=1), 1.0, atol=1e-6), "softmax rows must sum to 1"

    print("KERNEL_OK")
</pallas_src>

<mosaic_0001>
module attributes {stable_mosaic.version = 11 : i64} {
  func.func @mlp_kernel(%arg0: i32, %arg1: memref<128x20xf32, #tpu.memory_space<vmem>>, %arg2: memref<32x20xbf16, #tpu.memory_space<vmem>>, %arg3: memref<32x1xf32, #tpu.memory_space<vmem>>, %arg4: memref<6x32x32xbf16, #tpu.memory_space<vmem>>, %arg5: memref<2x128xf32, #tpu.memory_space<vmem>>) attributes {dimension_semantics = [#tpu.dimension_semantics<parallel>], iteration_bounds = array<i64: 1>, scalar_prefetch = 0 : i64, scratch_operands = 0 : i64, tpu.core_type = #tpu.core_type<tc>, window_params = [{transform_indices = @transform_0, window_bounds = array<i64: 128, 20>}, {pipeline_mode = #tpu.pipeline_mode<synchronous>, transform_indices = @transform_1, window_bounds = array<i64: 32, 20>}, {pipeline_mode = #tpu.pipeline_mode<synchronous>, transform_indices = @transform_2, window_bounds = array<i64: 32, 1>}, {pipeline_mode = #tpu.pipeline_mode<synchronous>, transform_indices = @transform_3, window_bounds = array<i64: 6, 32, 32>}, {transform_indices = @transform_4, window_bounds = array<i64: 2, 128>}]} {
    %c0 = arith.constant 0 : index
    %c0_0 = arith.constant 0 : index
    %0 = vector.load %arg1[%c0, %c0_0] : memref<128x20xf32, #tpu.memory_space<vmem>>, vector<128x20xf32>
    %1 = arith.truncf %0 : vector<128x20xf32> to vector<128x20xbf16>
    %c0_1 = arith.constant 0 : index
    %c0_2 = arith.constant 0 : index
    %2 = vector.load %arg2[%c0_1, %c0_2] : memref<32x20xbf16, #tpu.memory_space<vmem>>, vector<32x20xbf16>
    %cst = arith.constant dense<0.000000e+00> : vector<32x128xf32>
    %3 = tpu.matmul %2, %1, %cst {dimension_numbers = #tpu.dot_dimension_numbers<[1], [1], [0], [0], [0, 0, 1, 0], [], []>} : vector<32x20xbf16>, vector<128x20xbf16>, vector<32x128xf32> -> vector<32x128xf32>
    %c0_3 = arith.constant 0 : index
    %c0_4 = arith.constant 0 : index
    %4 = vector.load %arg3[%c0_3, %c0_4] : memref<32x1xf32, #tpu.memory_space<vmem>>, vector<32x1xf32>
    %5 = vector.broadcast %4 : vector<32x1xf32> to vector<32x128xf32>
    %6 = arith.addf %3, %5 : vector<32x128xf32>
    %cst_5 = arith.constant 0.000000e+00 : f32
    %7 = vector.broadcast %cst_5 : f32 to vector<32x128xf32>
    %8 = arith.maximumf %6, %7 : vector<32x128xf32>
    %9 = arith.truncf %8 : vector<32x128xf32> to vector<32x128xbf16>
    %c0_6 = arith.constant 0 : index
    %c0_7 = arith.constant 0 : index
    %c0_8 = arith.constant 0 : index
    %10 = vector.load %arg4[%c0_6, %c0_7, %c0_8] : memref<6x32x32xbf16, #tpu.memory_space<vmem>>, vector<1x32x32xbf16>
    %11 = vector.shape_cast %10 : vector<1x32x32xbf16> to vector<32x32xbf16>
    %cst_9 = arith.constant dense<0.000000e+00> : vector<32x128xf32>
    %12 = tpu.matmul %11, %9, %cst_9 {dimension_numbers = #tpu.dot_dimension_numbers<[1], [0], [0], [1], [0, 0, 1, 1], [], []>} : vector<32x32xbf16>, vector<32x128xbf16>, vector<32x128xf32> -> vector<32x128xf32>
    %cst_10 = arith.constant 0.000000e+00 : f32
    %13 = vector.broadcast %cst_10 : f32 to vector<32x128xf32>
    %14 = arith.maximumf %12, %13 : vector<32x128xf32>
    %15 = arith.truncf %14 : vector<32x128xf32> to vector<32x128xbf16>
    %c1 = arith.constant 1 : index
    %c0_11 = arith.constant 0 : index
    %c0_12 = arith.constant 0 : index
    %16 = vector.load %arg4[%c1, %c0_11, %c0_12] : memref<6x32x32xbf16, #tpu.memory_space<vmem>>, vector<1x32x32xbf16>
    %17 = vector.shape_cast %16 : vector<1x32x32xbf16> to vector<32x32xbf16>
    %cst_13 = arith.constant dense<0.000000e+00> : vector<32x128xf32>
    %18 = tpu.matmul %17, %15, %cst_13 {dimension_numbers = #tpu.dot_dimension_numbers<[1], [0], [0], [1], [0, 0, 1, 1], [], []>} : vector<32x32xbf16>, vector<32x128xbf16>, vector<32x128xf32> -> vector<32x128xf32>
    %cst_14 = arith.constant 0.000000e+00 : f32
    %19 = vector.broadcast %cst_14 : f32 to vector<32x128xf32>
    %20 = arith.maximumf %18, %19 : vector<32x128xf32>
    %21 = arith.truncf %20 : vector<32x128xf32> to vector<32x128xbf16>
    %c2 = arith.constant 2 : index
    %c0_15 = arith.constant 0 : index
    %c0_16 = arith.constant 0 : index
    %22 = vector.load %arg4[%c2, %c0_15, %c0_16] : memref<6x32x32xbf16, #tpu.memory_space<vmem>>, vector<1x32x32xbf16>
    %23 = vector.shape_cast %22 : vector<1x32x32xbf16> to vector<32x32xbf16>
    %cst_17 = arith.constant dense<0.000000e+00> : vector<32x128xf32>
    %24 = tpu.matmul %23, %21, %cst_17 {dimension_numbers = #tpu.dot_dimension_numbers<[1], [0], [0], [1], [0, 0, 1, 1], [], []>} : vector<32x32xbf16>, vector<32x128xbf16>, vector<32x128xf32> -> vector<32x128xf32>
    %cst_18 = arith.constant 0.000000e+00 : f32
    %25 = vector.broadcast %cst_18 : f32 to vector<32x128xf32>
    %26 = arith.maximumf %24, %25 : vector<32x128xf32>
    %27 = arith.truncf %26 : vector<32x128xf32> to vector<32x128xbf16>
    %c3 = arith.constant 3 : index
    %c0_19 = arith.constant 0 : index
    %c0_20 = arith.constant 0 : index
    %28 = vector.load %arg4[%c3, %c0_19, %c0_20] : memref<6x32x32xbf16, #tpu.memory_space<vmem>>, vector<1x32x32xbf16>
    %29 = vector.shape_cast %28 : vector<1x32x32xbf16> to vector<32x32xbf16>
    %cst_21 = arith.constant dense<0.000000e+00> : vector<32x128xf32>
    %30 = tpu.matmul %29, %27, %cst_21 {dimension_numbers = #tpu.dot_dimension_numbers<[1], [0], [0], [1], [0, 0, 1, 1], [], []>} : vector<32x32xbf16>, vector<32x128xbf16>, vector<32x128xf32> -> vector<32x128xf32>
    %cst_22 = arith.constant 0.000000e+00 : f32
    %31 = vector.broadcast %cst_22 : f32 to vector<32x128xf32>
    %32 = arith.maximumf %30, %31 : vector<32x128xf32>
    %33 = arith.truncf %32 : vector<32x128xf32> to vector<32x128xbf16>
    %c4 = arith.constant 4 : index
    %c0_23 = arith.constant 0 : index
    %c0_24 = arith.constant 0 : index
    %34 = vector.load %arg4[%c4, %c0_23, %c0_24] : memref<6x32x32xbf16, #tpu.memory_space<vmem>>, vector<1x32x32xbf16>
    %35 = vector.shape_cast %34 : vector<1x32x32xbf16> to vector<32x32xbf16>
    %cst_25 = arith.constant dense<0.000000e+00> : vector<32x128xf32>
    %36 = tpu.matmul %35, %33, %cst_25 {dimension_numbers = #tpu.dot_dimension_numbers<[1], [0], [0], [1], [0, 0, 1, 1], [], []>} : vector<32x32xbf16>, vector<32x128xbf16>, vector<32x128xf32> -> vector<32x128xf32>
    %cst_26 = arith.constant 0.000000e+00 : f32
    %37 = vector.broadcast %cst_26 : f32 to vector<32x128xf32>
    %38 = arith.maximumf %36, %37 : vector<32x128xf32>
    %39 = arith.truncf %38 : vector<32x128xf32> to vector<32x128xbf16>
    %c5 = arith.constant 5 : index
    %c0_27 = arith.constant 0 : index
    %c0_28 = arith.constant 0 : index
    %40 = vector.load %arg4[%c5, %c0_27, %c0_28] : memref<6x32x32xbf16, #tpu.memory_space<vmem>>, vector<1x32x32xbf16>
    %41 = vector.shape_cast %40 : vector<1x32x32xbf16> to vector<32x32xbf16>
    %cst_29 = arith.constant dense<0.000000e+00> : vector<32x128xf32>
    %42 = tpu.matmul %41, %39, %cst_29 {dimension_numbers = #tpu.dot_dimension_numbers<[1], [0], [0], [1], [0, 0, 1, 1], [], []>} : vector<32x32xbf16>, vector<32x128xbf16>, vector<32x128xf32> -> vector<32x128xf32>
    %43 = vector.extract_strided_slice %42 {offsets = [0, 0], sizes = [1, 128], strides = [1, 1]} : vector<32x128xf32> to vector<1x128xf32>
    %44 = vector.extract_strided_slice %42 {offsets = [1, 0], sizes = [1, 128], strides = [1, 1]} : vector<32x128xf32> to vector<1x128xf32>
    %45 = arith.subf %43, %44 : vector<1x128xf32>
    %46 = math.exp %45 : vector<1x128xf32>
    %cst_30 = arith.constant 1.000000e+00 : f32
    %47 = vector.broadcast %cst_30 : f32 to vector<1x128xf32>
    %48 = arith.addf %47, %46 : vector<1x128xf32>
    %cst_31 = arith.constant 1.000000e+00 : f32
    %49 = vector.broadcast %cst_31 : f32 to vector<1x128xf32>
    %50 = arith.divf %49, %48 : vector<1x128xf32>
    %cst_32 = arith.constant 1.000000e+00 : f32
    %51 = vector.broadcast %cst_32 : f32 to vector<1x128xf32>
    %52 = arith.subf %51, %50 : vector<1x128xf32>
    %c0_33 = arith.constant 0 : index
    %c0_34 = arith.constant 0 : index
    %53 = vector.load %arg5[%c0_33, %c0_34] : memref<2x128xf32, #tpu.memory_space<vmem>>, vector<1x128xf32>
    tpu.vector_store %arg5[%c0_33, %c0_34], %52 {strides = array<i32>} : memref<2x128xf32, #tpu.memory_space<vmem>>, vector<1x128xf32>,
    %c1_35 = arith.constant 1 : index
    %c0_36 = arith.constant 0 : index
    %54 = vector.load %arg5[%c1_35, %c0_36] : memref<2x128xf32, #tpu.memory_space<vmem>>, vector<1x128xf32>
    tpu.vector_store %arg5[%c1_35, %c0_36], %50 {strides = array<i32>} : memref<2x128xf32, #tpu.memory_space<vmem>>, vector<1x128xf32>,
    return
  }
  func.func @transform_0(%arg0: i32) -> (i32, i32) {
    %c0_i32 = arith.constant 0 : i32
    %c0_i32_0 = arith.constant 0 : i32
    return %arg0, %c0_i32 : i32, i32
  }
  func.func @transform_1(%arg0: i32) -> (i32, i32) {
    %c0_i32 = arith.constant 0 : i32
    %c0_i32_0 = arith.constant 0 : i32
    %c0_i32_1 = arith.constant 0 : i32
    return %c0_i32, %c0_i32_0 : i32, i32
  }
  func.func @transform_2(%arg0: i32) -> (i32, i32) {
    %c0_i32 = arith.constant 0 : i32
    %c0_i32_0 = arith.constant 0 : i32
    %c0_i32_1 = arith.constant 0 : i32
    return %c0_i32, %c0_i32_0 : i32, i32
  }
  func.func @transform_3(%arg0: i32) -> (i32, i32, i32) {
    %c0_i32 = arith.constant 0 : i32
    %c0_i32_0 = arith.constant 0 : i32
    %c0_i32_1 = arith.constant 0 : i32
    %c0_i32_2 = arith.constant 0 : i32
    return %c0_i32, %c0_i32_0, %c0_i32_1 : i32, i32, i32
  }
  func.func @transform_4(%arg0: i32) -> (i32, i32) {
    %c0_i32 = arith.constant 0 : i32
    %c0_i32_0 = arith.constant 0 : i32
    return %c0_i32, %arg0 : i32, i32
  }
}

</mosaic_0001>

<llo_original>
// kernel: nn_forward.1
$region0: #{nn_forward.1}
  #allocation0 [shape = 'u32[]', space=smem, size = 0x4, offset = 0x4, fixed_abs, tag = 'smem constant byte address 0x4 - core index']
  #allocation1 [shape = 'u32[144,128]{1,0:T(1,128)}', space=vmem, size = 0x12000, scoped, tag = 'internal scratch']
  %s0 = inlined_call_operand.vmem [shape: f32[128,20], index: 0, kind: input, shape index: {}]
  %s1 = inlined_call_operand.vmem [shape: bf16[32,20], index: 1, kind: input, shape index: {}]
  %s2 = inlined_call_operand.vmem [shape: f32[32,1], index: 2, kind: input, shape index: {}]
  %s3 = inlined_call_operand.vmem [shape: bf16[6,32,32], index: 3, kind: input, shape index: {}]
  %s4 = inlined_call_operand.vmem [shape: f32[2,128], index: 4, kind: output, shape index: {}]
  %s5 = sld [smem:[#allocation0]]
  $region26: #{nn_forward.1} parent=0
    _
  %s7 = ssub.s32 1, %s5
  %s8 = scalar_select 0, %s7, %s5
  // Predicated region
  $region2: #{nn_forward.1} parent=0 // pred_check
    _
  $region3: #{nn_forward.1} parent=0 // pred_check_branch
    %10 = sbr.rel (0) target = $region5
  $region4: #{nn_forward.1} parent=0 // pred_region
    _
  $region5: #{nn_forward.1} parent=0 // pred_fallthru
    _
  // Predicated region
  $region6: #{nn_forward.1} parent=0 // pred_check
    _
  $region7: #{nn_forward.1} parent=0 // pred_check_branch
    %12 = sbr.rel (0) target = $region9
  $region8: #{nn_forward.1} parent=0 // pred_region
    _
  $region9: #{nn_forward.1} parent=0 // pred_fallthru
    _
  // Predicated region
  $region10: #{nn_forward.1} parent=0 // pred_check
    _
  $region11: #{nn_forward.1} parent=0 // pred_check_branch
    %14 = sbr.rel (0) target = $region13
  $region12: #{nn_forward.1} parent=0 // pred_region
    _
  $region13: #{nn_forward.1} parent=0 // pred_fallthru
    _
  // Predicated region
  $region14: #{nn_forward.1} parent=0 // pred_check
    _
  $region15: #{nn_forward.1} parent=0 // pred_check_branch
    %16 = sbr.rel (0) target = $region17
  $region16: #{nn_forward.1} parent=0 // pred_region
    _
  $region17: #{nn_forward.1} parent=0 // pred_fallthru
    _
  %v18 = vld [vmem:[%s0] sm:$0xff]
  %v19 = vld [vmem:[%s0 + $0x8] sm:$0xff]
  %v20 = vld [vmem:[%s0 + $0x10] sm:$0xff]
  %v21 = vld [vmem:[%s0 + $0x18] sm:$0xff]
  %v22 = vld [vmem:[%s0 + $0x20] sm:$0xff]
  %v23 = vld [vmem:[%s0 + $0x28] sm:$0xff]
  %v24 = vld [vmem:[%s0 + $0x30] sm:$0xff]
  %v25 = vld [vmem:[%s0 + $0x38] sm:$0xff]
  %v26 = vld [vmem:[%s0 + $0x40] sm:$0xff]
  %v27 = vld [vmem:[%s0 + $0x48] sm:$0xff]
  %v28 = vld [vmem:[%s0 + $0x50] sm:$0xff]
  %v29 = vld [vmem:[%s0 + $0x58] sm:$0xff]
  %v30 = vld [vmem:[%s0 + $0x60] sm:$0xff]
  %v31 = vld [vmem:[%s0 + $0x68] sm:$0xff]
  %v32 = vld [vmem:[%s0 + $0x70] sm:$0xff]
  %v33 = vld [vmem:[%s0 + $0x78] sm:$0xff]
  %v34 = vpack.c.bf16 %v19, %v18
  %v35 = vpack.c.bf16 %v21, %v20
  %v36 = vpack.c.bf16 %v23, %v22
  %v37 = vpack.c.bf16 %v25, %v24
  %v38 = vpack.c.bf16 %v27, %v26
  %v39 = vpack.c.bf16 %v29, %v28
  %v40 = vpack.c.bf16 %v31, %v30
  %v41 = vpack.c.bf16 %v33, %v32
  %v42 = vld [vmem:[%s1] sm:$0xf]
  %v43 = vld [vmem:[%s1 + $0x4] sm:$0xf]
  %v44 = vld [vmem:[%s1 + $0x8] sm:$0xf]
  %v45 = vld [vmem:[%s1 + $0xc] sm:$0xf]
  %v46 = vld [vmem:[%s2] sm:$0xff]
  %v47 = vld [vmem:[%s2 + $0x8] sm:$0xff]
  %v48 = vld [vmem:[%s2 + $0x10] sm:$0xff]
  %v49 = vld [vmem:[%s2 + $0x18] sm:$0xff]
  %51 = vset.pattern.permute.xlu0 0
  %52 = vperm.xlu0 %51, %v46
  %v53 = vpop.permute.xlu0 %52
  %56 = vset.pattern.permute.xlu0 0
  %57 = vperm.xlu0 %56, %v47
  %v58 = vpop.permute.xlu0 %57
  %61 = vset.pattern.permute.xlu0 0
  %62 = vperm.xlu0 %61, %v48
  %v63 = vpop.permute.xlu0 %62
  %66 = vset.pattern.permute.xlu0 0
  %67 = vperm.xlu0 %66, %v49
  %v68 = vpop.permute.xlu0 %67
  %v74 = vunpack.c.l.b16 %v42
  %v75 = vunpack.c.l.b16 %v43
  %v76 = vunpack.c.l.b16 %v44
  %v77 = vunpack.c.l.b16 %v45
  %v78 = vpack.c.b16 %v75, %v74
  %v79 = vpack.c.b16 %v77, %v76
  %vm80 = vcmask 162816
  %v82 = vsel %vm80, %v78, 0
  %v85 = vsel %vm80, %v79, 0
  %v88 = vsel %vm80, %v34, 0
  %v91 = vsel %vm80, %v35, 0
  %v94 = vsel %vm80, %v36, 0
  %v97 = vsel %vm80, %v37, 0
  %v100 = vsel %vm80, %v38, 0
  %v103 = vsel %vm80, %v39, 0
  %v106 = vsel %vm80, %v40, 0
  %v109 = vsel %vm80, %v41, 0
  %111 = vmatprep.subr.bf16.mxu0 0
  %112 = vmatpush1.bf16.xpose.msra.mxu0 %v88
  %113 = vmatprep.subr.bf16.mxu0 0
  %114 = vmatpush1.bf16.xpose.msra.mxu0 %v91
  %115 = vmatprep.subr.bf16.mxu0 0
  %116 = vmatpush1.bf16.xpose.msra.mxu0 %v94
  %117 = vmatprep.subr.bf16.mxu0 0
  %118 = vmatpush1.bf16.xpose.msra.mxu0 %v97
  %119 = vmatprep.subr.bf16.mxu0 0
  %120 = vmatpush1.bf16.xpose.msra.mxu0 %v100
  %121 = vmatprep.subr.bf16.mxu0 0
  %122 = vmatpush1.bf16.xpose.msra.mxu0 %v103
  %123 = vmatprep.subr.bf16.mxu0 0
  %124 = vmatpush1.bf16.xpose.msra.mxu0 %v106
  %125 = vmatprep.subr.bf16.mxu0 0
  %126 = vmatpush1.bf16.xpose.msra.mxu0 %v109
  %127 = vmatprep.subr.bf16.mxu0 0
  %128 = vmatpush1.bf16.xpose.msra.mxu0 0
  %129 = vmatprep.subr.bf16.mxu0 0
  %130 = vmatpush1.bf16.xpose.msra.mxu0 0
  %131 = vmatprep.subr.bf16.mxu0 0
  %132 = vmatpush1.bf16.xpose.msra.mxu0 0
  %133 = vmatprep.subr.bf16.mxu0 0
  %134 = vmatpush1.bf16.xpose.msra.mxu0 0
  %135 = vmatprep.subr.bf16.mxu0 0
  %136 = vmatpush1.bf16.xpose.msra.mxu0 0
  %137 = vmatprep.subr.bf16.mxu0 0
  %138 = vmatpush1.bf16.xpose.msra.mxu0 0
  %139 = vmatprep.subr.bf16.mxu0 0
  %140 = vmatpush1.bf16.xpose.msra.mxu0 0
  %141 = vmatprep.subr.bf16.mxu0 0
  %142 = vmatpush1.bf16.xpose.msra.mxu0 0
  %143 = vmatprep.mubr.bf16.mxu0 0
  %144 = vmatmul.mubr.bf16.gmra.mrb[0].mxu0 %v82
  %v145 = vpop.f32.mrb[0].mxu0
  %v146 = vadd.f32 %v53, %v145
  %v147 = vpop.f32.mrb[0].mxu0
  %v148 = vpop.f32.mrb[0].mxu0
  %v149 = vadd.f32 %v58, %v148
  %v150 = vpop.f32.mrb[0].mxu0
  %151 = vmatprep.mubr.bf16.mxu0 0
  %152 = vmatmul.mubr.bf16.gmra.mrb[0].mxu0 %v85
  %v153 = vpop.f32.mrb[0].mxu0
  %v154 = vadd.f32 %v63, %v153
  %v155 = vpop.f32.mrb[0].mxu0
  %v156 = vpop.f32.mrb[0].mxu0
  %v157 = vadd.f32 %v68, %v156
  %v158 = vpop.f32.mrb[0].mxu0
  %159 = vdwg.mxu0
  %v160 = vmax.f32 %v146, 0.0
  %v161 = vmax.f32 %v149, 0.0
  %v162 = vmax.f32 %v154, 0.0
  %v163 = vmax.f32 %v157, 0.0
  %v164 = vpack.c.bf16 %v161, %v160
  %v165 = vpack.c.bf16 %v163, %v162
  %v166 = vld [vmem:[%s3] sm:$0xf]
  %v167 = vld [vmem:[%s3 + $0x4] sm:$0xf]
  %v168 = vld [vmem:[%s3 + $0x8] sm:$0xf]
  %v169 = vld [vmem:[%s3 + $0xc] sm:$0xf]
  %v174 = vunpack.c.l.b16 %v166
  %v175 = vunpack.c.l.b16 %v167
  %v176 = vunpack.c.l.b16 %v168
  %v177 = vunpack.c.l.b16 %v169
  %v178 = vpack.c.b16 %v175, %v174
  %v179 = vpack.c.b16 %v177, %v176
  %vm180 = vcmask 261120
  %v182 = vsel %vm180, %v178, 0
  %v185 = vsel %vm180, %v179, 0
  %187 = vmatprep.subr.bf16.mxu0 0
  %188 = vmatpush1.bf16.msra.mxu0 %v164
  %189 = vmatprep.subr.bf16.mxu0 0
  %190 = vmatpush1.bf16.msra.mxu0 %v165
  %191 = vmatprep.subr.bf16.mxu0 0
  %192 = vmatpush1.bf16.msra.mxu0 0
  %193 = vmatprep.subr.bf16.mxu0 0
  %194 = vmatpush1.bf16.msra.mxu0 0
  %195 = vmatprep.subr.bf16.mxu0 0
  %196 = vmatpush1.bf16.msra.mxu0 0
  %197 = vmatprep.subr.bf16.mxu0 0
  %198 = vmatpush1.bf16.msra.mxu0 0
  %199 = vmatprep.subr.bf16.mxu0 0
  %200 = vmatpush1.bf16.msra.mxu0 0
  %201 = vmatprep.subr.bf16.mxu0 0
  %202 = vmatpush1.bf16.msra.mxu0 0
  %203 = vmatprep.subr.bf16.mxu0 0
  %204 = vmatpush1.bf16.msra.mxu0 0
  %205 = vmatprep.subr.bf16.mxu0 0
  %206 = vmatpush1.bf16.msra.mxu0 0
  %207 = vmatprep.subr.bf16.mxu0 0
  %208 = vmatpush1.bf16.msra.mxu0 0
  %209 = vmatprep.subr.bf16.mxu0 0
  %210 = vmatpush1.bf16.msra.mxu0 0
  %211 = vmatprep.subr.bf16.mxu0 0
  %212 = vmatpush1.bf16.msra.mxu0 0
  %213 = vmatprep.subr.bf16.mxu0 0
  %214 = vmatpush1.bf16.msra.mxu0 0
  %215 = vmatprep.subr.bf16.mxu0 0
  %216 = vmatpush1.bf16.msra.mxu0 0
  %217 = vmatprep.subr.bf16.mxu0 0
  %218 = vmatpush1.bf16.msra.mxu0 0
  %219 = vmatprep.mubr.bf16.mxu0 0
  %220 = vmatmul.mubr.bf16.gmra.mrb[0].mxu0 %v182
  %v221 = vpop.f32.mrb[0].mxu0
  %v222 = vadd.f32 0.0, %v221
  %v223 = vpop.f32.mrb[0].mxu0
  %v224 = vpop.f32.mrb[0].mxu0
  %v225 = vadd.f32 0.0, %v224
  %v226 = vpop.f32.mrb[0].mxu0
  %227 = vmatprep.mubr.bf16.mxu0 0
  %228 = vmatmul.mubr.bf16.gmra.mrb[0].mxu0 %v185
  %v229 = vpop.f32.mrb[0].mxu0
  %v230 = vadd.f32 0.0, %v229
  %v231 = vpop.f32.mrb[0].mxu0
  %v232 = vpop.f32.mrb[0].mxu0
  %v233 = vadd.f32 0.0, %v232
  %v234 = vpop.f32.mrb[0].mxu0
  %235 = vdwg.mxu0
  %v236 = vmax.f32 %v222, 0.0
  %v237 = vmax.f32 %v225, 0.0
  %v238 = vmax.f32 %v230, 0.0
  %v239 = vmax.f32 %v233, 0.0
  %v240 = vpack.c.bf16 %v237, %v236
  %v241 = vpack.c.bf16 %v239, %v238
  %s242 = scalar_lea.vmem %s3, 16
  %v243 = vld [vmem:[%s242] sm:$0xf]
  %v244 = vld [vmem:[%s242 + $0x4] sm:$0xf]
  %v245 = vld [vmem:[%s242 + $0x8] sm:$0xf]
  %v246 = vld [vmem:[%s242 + $0xc] sm:$0xf]
  %v251 = vunpack.c.l.b16 %v243
  %v252 = vunpack.c.l.b16 %v244
  %v253 = vunpack.c.l.b16 %v245
  %v254 = vunpack.c.l.b16 %v246
  %v255 = vpack.c.b16 %v252, %v251
  %v256 = vpack.c.b16 %v254, %v253
  %v258 = vsel %vm180, %v255, 0
  %v261 = vsel %vm180, %v256, 0
  %263 = vmatprep.subr.bf16.mxu0 0
  %264 = vmatpush1.bf16.msra.mxu0 %v240
  %265 = vmatprep.subr.bf16.mxu0 0
  %266 = vmatpush1.bf16.msra.mxu0 %v241
  %267 = vmatprep.subr.bf16.mxu0 0
  %268 = vmatpush1.bf16.msra.mxu0 0
  %269 = vmatprep.subr.bf16.mxu0 0
  %270 = vmatpush1.bf16.msra.mxu0 0
  %271 = vmatprep.subr.bf16.mxu0 0
  %272 = vmatpush1.bf16.msra.mxu0 0
  %273 = vmatprep.subr.bf16.mxu0 0
  %274 = vmatpush1.bf16.msra.mxu0 0
  %275 = vmatprep.subr.bf16.mxu0 0
  %276 = vmatpush1.bf16.msra.mxu0 0
  %277 = vmatprep.subr.bf16.mxu0 0
  %278 = vmatpush1.bf16.msra.mxu0 0
  %279 = vmatprep.subr.bf16.mxu0 0
  %280 = vmatpush1.bf16.msra.mxu0 0
  %281 = vmatprep.subr.bf16.mxu0 0
  %282 = vmatpush1.bf16.msra.mxu0 0
  %283 = vmatprep.subr.bf16.mxu0 0
  %284 = vmatpush1.bf16.msra.mxu0 0
  %285 = vmatprep.subr.bf16.mxu0 0
  %286 = vmatpush1.bf16.msra.mxu0 0
  %287 = vmatprep.subr.bf16.mxu0 0
  %288 = vmatpush1.bf16.msra.mxu0 0
  %289 = vmatprep.subr.bf16.mxu0 0
  %290 = vmatpush1.bf16.msra.mxu0 0
  %291 = vmatprep.subr.bf16.mxu0 0
  %292 = vmatpush1.bf16.msra.mxu0 0
  %293 = vmatprep.subr.bf16.mxu0 0
  %294 = vmatpush1.bf16.msra.mxu0 0
  %295 = vmatprep.mubr.bf16.mxu0 0
  %296 = vmatmul.mubr.bf16.gmra.mrb[0].mxu0 %v258
  %v297 = vpop.f32.mrb[0].mxu0
  %v298 = vadd.f32 0.0, %v297
  %v299 = vpop.f32.mrb[0].mxu0
  %v300 = vpop.f32.mrb[0].mxu0
  %v301 = vadd.f32 0.0, %v300
  %v302 = vpop.f32.mrb[0].mxu0
  %303 = vmatprep.mubr.bf16.mxu0 0
  %304 = vmatmul.mubr.bf16.gmra.mrb[0].mxu0 %v261
  %v305 = vpop.f32.mrb[0].mxu0
  %v306 = vadd.f32 0.0, %v305
  %v307 = vpop.f32.mrb[0].mxu0
  %v308 = vpop.f32.mrb[0].mxu0
  %v309 = vadd.f32 0.0, %v308
  %v310 = vpop.f32.mrb[0].mxu0
  %311 = vdwg.mxu0
  %v312 = vmax.f32 %v298, 0.0
  %v313 = vmax.f32 %v301, 0.0
  %v314 = vmax.f32 %v306, 0.0
  %v315 = vmax.f32 %v309, 0.0
  %v316 = vpack.c.bf16 %v313, %v312
  %v317 = vpack.c.bf16 %v315, %v314
  %s318 = scalar_lea.vmem %s3, 32
  %v319 = vld [vmem:[%s318] sm:$0xf]
  %v320 = vld [vmem:[%s318 + $0x4] sm:$0xf]
  %v321 = vld [vmem:[%s318 + $0x8] sm:$0xf]
  %v322 = vld [vmem:[%s318 + $0xc] sm:$0xf]
  %v327 = vunpack.c.l.b16 %v319
  %v328 = vunpack.c.l.b16 %v320
  %v329 = vunpack.c.l.b16 %v321
  %v330 = vunpack.c.l.b16 %v322
  %v331 = vpack.c.b16 %v328, %v327
  %v332 = vpack.c.b16 %v330, %v329
  %v334 = vsel %vm180, %v331, 0
  %v337 = vsel %vm180, %v332, 0
  %339 = vmatprep.subr.bf16.mxu0 0
  %340 = vmatpush1.bf16.msra.mxu0 %v316
  %341 = vmatprep.subr.bf16.mxu0 0
  %342 = vmatpush1.bf16.msra.mxu0 %v317
  %343 = vmatprep.subr.bf16.mxu0 0
  %344 = vmatpush1.bf16.msra.mxu0 0
  %345 = vmatprep.subr.bf16.mxu0 0
  %346 = vmatpush1.bf16.msra.mxu0 0
  %347 = vmatprep.subr.bf16.mxu0 0
  %348 = vmatpush1.bf16.msra.mxu0 0
  %349 = vmatprep.subr.bf16.mxu0 0
  %350 = vmatpush1.bf16.msra.mxu0 0
  %351 = vmatprep.subr.bf16.mxu0 0
  %352 = vmatpush1.bf16.msra.mxu0 0
  %353 = vmatprep.subr.bf16.mxu0 0
  %354 = vmatpush1.bf16.msra.mxu0 0
  %355 = vmatprep.subr.bf16.mxu0 0
  %356 = vmatpush1.bf16.msra.mxu0 0
  %357 = vmatprep.subr.bf16.mxu0 0
  %358 = vmatpush1.bf16.msra.mxu0 0
  %359 = vmatprep.subr.bf16.mxu0 0
  %360 = vmatpush1.bf16.msra.mxu0 0
  %361 = vmatprep.subr.bf16.mxu0 0
  %362 = vmatpush1.bf16.msra.mxu0 0
  %363 = vmatprep.subr.bf16.mxu0 0
  %364 = vmatpush1.bf16.msra.mxu0 0
  %365 = vmatprep.subr.bf16.mxu0 0
  %366 = vmatpush1.bf16.msra.mxu0 0
  %367 = vmatprep.subr.bf16.mxu0 0
  %368 = vmatpush1.bf16.msra.mxu0 0
  %369 = vmatprep.subr.bf16.mxu0 0
  %370 = vmatpush1.bf16.msra.mxu0 0
  %371 = vmatprep.mubr.bf16.mxu0 0
  %372 = vmatmul.mubr.bf16.gmra.mrb[0].mxu0 %v334
  %v373 = vpop.f32.mrb[0].mxu0
  %v374 = vadd.f32 0.0, %v373
  %v375 = vpop.f32.mrb[0].mxu0
  %v376 = vpop.f32.mrb[0].mxu0
  %v377 = vadd.f32 0.0, %v376
  %v378 = vpop.f32.mrb[0].mxu0
  %379 = vmatprep.mubr.bf16.mxu0 0
  %380 = vmatmul.mubr.bf16.gmra.mrb[0].mxu0 %v337
  %v381 = vpop.f32.mrb[0].mxu0
  %v382 = vadd.f32 0.0, %v381
  %v383 = vpop.f32.mrb[0].mxu0
  %v384 = vpop.f32.mrb[0].mxu0
  %v385 = vadd.f32 0.0, %v384
  %v386 = vpop.f32.mrb[0].mxu0
  %387 = vdwg.mxu0
  %v388 = vmax.f32 %v374, 0.0
  %v389 = vmax.f32 %v377, 0.0
  %v390 = vmax.f32 %v382, 0.0
  %v391 = vmax.f32 %v385, 0.0
  %v392 = vpack.c.bf16 %v389, %v388
  %v393 = vpack.c.bf16 %v391, %v390
  %s394 = scalar_lea.vmem %s3, 48
  %v395 = vld [vmem:[%s394] sm:$0xf]
  %v396 = vld [vmem:[%s394 + $0x4] sm:$0xf]
  %v397 = vld [vmem:[%s394 + $0x8] sm:$0xf]
  %v398 = vld [vmem:[%s394 + $0xc] sm:$0xf]
  %v403 = vunpack.c.l.b16 %v395
  %v404 = vunpack.c.l.b16 %v396
  %v405 = vunpack.c.l.b16 %v397
  %v406 = vunpack.c.l.b16 %v398
  %v407 = vpack.c.b16 %v404, %v403
  %v408 = vpack.c.b16 %v406, %v405
  %v410 = vsel %vm180, %v407, 0
  %v413 = vsel %vm180, %v408, 0
  %415 = vmatprep.subr.bf16.mxu0 0
  %416 = vmatpush1.bf16.msra.mxu0 %v392
  %417 = vmatprep.subr.bf16.mxu0 0
  %418 = vmatpush1.bf16.msra.mxu0 %v393
  %419 = vmatprep.subr.bf16.mxu0 0
  %420 = vmatpush1.bf16.msra.mxu0 0
  %421 = vmatprep.subr.bf16.mxu0 0
  %422 = vmatpush1.bf16.msra.mxu0 0
  %423 = vmatprep.subr.bf16.mxu0 0
  %424 = vmatpush1.bf16.msra.mxu0 0
  %425 = vmatprep.subr.bf16.mxu0 0
  %426 = vmatpush1.bf16.msra.mxu0 0
  %427 = vmatprep.subr.bf16.mxu0 0
  %428 = vmatpush1.bf16.msra.mxu0 0
  %429 = vmatprep.subr.bf16.mxu0 0
  %430 = vmatpush1.bf16.msra.mxu0 0
  %431 = vmatprep.subr.bf16.mxu0 0
  %432 = vmatpush1.bf16.msra.mxu0 0
  %433 = vmatprep.subr.bf16.mxu0 0
  %434 = vmatpush1.bf16.msra.mxu0 0
  %435 = vmatprep.subr.bf16.mxu0 0
  %436 = vmatpush1.bf16.msra.mxu0 0
  %437 = vmatprep.subr.bf16.mxu0 0
  %438 = vmatpush1.bf16.msra.mxu0 0
  %439 = vmatprep.subr.bf16.mxu0 0
  %440 = vmatpush1.bf16.msra.mxu0 0
  %441 = vmatprep.subr.bf16.mxu0 0
  %442 = vmatpush1.bf16.msra.mxu0 0
  %443 = vmatprep.subr.bf16.mxu0 0
  %444 = vmatpush1.bf16.msra.mxu0 0
  %445 = vmatprep.subr.bf16.mxu0 0
  %446 = vmatpush1.bf16.msra.mxu0 0
  %447 = vmatprep.mubr.bf16.mxu0 0
  %448 = vmatmul.mubr.bf16.gmra.mrb[0].mxu0 %v410
  %v449 = vpop.f32.mrb[0].mxu0
  %v450 = vadd.f32 0.0, %v449
  %v451 = vpop.f32.mrb[0].mxu0
  %v452 = vpop.f32.mrb[0].mxu0
  %v453 = vadd.f32 0.0, %v452
  %v454 = vpop.f32.mrb[0].mxu0
  %455 = vmatprep.mubr.bf16.mxu0 0
  %456 = vmatmul.mubr.bf16.gmra.mrb[0].mxu0 %v413
  %v457 = vpop.f32.mrb[0].mxu0
  %v458 = vadd.f32 0.0, %v457
  %v459 = vpop.f32.mrb[0].mxu0
  %v460 = vpop.f32.mrb[0].mxu0
  %v461 = vadd.f32 0.0, %v460
  %v462 = vpop.f32.mrb[0].mxu0
  %463 = vdwg.mxu0
  %v464 = vmax.f32 %v450, 0.0
  %v465 = vmax.f32 %v453, 0.0
  %v466 = vmax.f32 %v458, 0.0
  %v467 = vmax.f32 %v461, 0.0
  %v468 = vpack.c.bf16 %v465, %v464
  %v469 = vpack.c.bf16 %v467, %v466
  %s470 = scalar_lea.vmem %s3, 64
  %v471 = vld [vmem:[%s470] sm:$0xf]
  %v472 = vld [vmem:[%s470 + $0x4] sm:$0xf]
  %v473 = vld [vmem:[%s470 + $0x8] sm:$0xf]
  %v474 = vld [vmem:[%s470 + $0xc] sm:$0xf]
  %v479 = vunpack.c.l.b16 %v471
  %v480 = vunpack.c.l.b16 %v472
  %v481 = vunpack.c.l.b16 %v473
  %v482 = vunpack.c.l.b16 %v474
  %v483 = vpack.c.b16 %v480, %v479
  %v484 = vpack.c.b16 %v482, %v481
  %v486 = vsel %vm180, %v483, 0
  %v489 = vsel %vm180, %v484, 0
  %491 = vmatprep.subr.bf16.mxu0 0
  %492 = vmatpush1.bf16.msra.mxu0 %v468
  %493 = vmatprep.subr.bf16.mxu0 0
  %494 = vmatpush1.bf16.msra.mxu0 %v469
  %495 = vmatprep.subr.bf16.mxu0 0
  %496 = vmatpush1.bf16.msra.mxu0 0
  %497 = vmatprep.subr.bf16.mxu0 0
  %498 = vmatpush1.bf16.msra.mxu0 0
  %499 = vmatprep.subr.bf16.mxu0 0
  %500 = vmatpush1.bf16.msra.mxu0 0
  %501 = vmatprep.subr.bf16.mxu0 0
  %502 = vmatpush1.bf16.msra.mxu0 0
  %503 = vmatprep.subr.bf16.mxu0 0
  %504 = vmatpush1.bf16.msra.mxu0 0
  %505 = vmatprep.subr.bf16.mxu0 0
  %506 = vmatpush1.bf16.msra.mxu0 0
  %507 = vmatprep.subr.bf16.mxu0 0
  %508 = vmatpush1.bf16.msra.mxu0 0
  %509 = vmatprep.subr.bf16.mxu0 0
  %510 = vmatpush1.bf16.msra.mxu0 0
  %511 = vmatprep.subr.bf16.mxu0 0
  %512 = vmatpush1.bf16.msra.mxu0 0
  %513 = vmatprep.subr.bf16.mxu0 0
  %514 = vmatpush1.bf16.msra.mxu0 0
  %515 = vmatprep.subr.bf16.mxu0 0
  %516 = vmatpush1.bf16.msra.mxu0 0
  %517 = vmatprep.subr.bf16.mxu0 0
  %518 = vmatpush1.bf16.msra.mxu0 0
  %519 = vmatprep.subr.bf16.mxu0 0
  %520 = vmatpush1.bf16.msra.mxu0 0
  %521 = vmatprep.subr.bf16.mxu0 0
  %522 = vmatpush1.bf16.msra.mxu0 0
  %523 = vmatprep.mubr.bf16.mxu0 0
  %524 = vmatmul.mubr.bf16.gmra.mrb[0].mxu0 %v486
  %v525 = vpop.f32.mrb[0].mxu0
  %v526 = vadd.f32 0.0, %v525
  %v527 = vpop.f32.mrb[0].mxu0
  %v528 = vpop.f32.mrb[0].mxu0
  %v529 = vadd.f32 0.0, %v528
  %v530 = vpop.f32.mrb[0].mxu0
  %531 = vmatprep.mubr.bf16.mxu0 0
  %532 = vmatmul.mubr.bf16.gmra.mrb[0].mxu0 %v489
  %v533 = vpop.f32.mrb[0].mxu0
  %v534 = vadd.f32 0.0, %v533
  %v535 = vpop.f32.mrb[0].mxu0
  %v536 = vpop.f32.mrb[0].mxu0
  %v537 = vadd.f32 0.0, %v536
  %v538 = vpop.f32.mrb[0].mxu0
  %539 = vdwg.mxu0
  %v540 = vmax.f32 %v526, 0.0
  %v541 = vmax.f32 %v529, 0.0
  %v542 = vmax.f32 %v534, 0.0
  %v543 = vmax.f32 %v537, 0.0
  %v544 = vpack.c.bf16 %v541, %v540
  %v545 = vpack.c.bf16 %v543, %v542
  %s546 = scalar_lea.vmem %s3, 80
  %v547 = vld [vmem:[%s546] sm:$0xf]
  %v548 = vld [vmem:[%s546 + $0x4] sm:$0xf]
  %v549 = vld [vmem:[%s546 + $0x8] sm:$0xf]
  %v550 = vld [vmem:[%s546 + $0xc] sm:$0xf]
  %v555 = vunpack.c.l.b16 %v547
  %v556 = vunpack.c.l.b16 %v548
  %v557 = vunpack.c.l.b16 %v549
  %v558 = vunpack.c.l.b16 %v550
  %v559 = vpack.c.b16 %v556, %v555
  %v560 = vpack.c.b16 %v558, %v557
  %v562 = vsel %vm180, %v559, 0
  %v565 = vsel %vm180, %v560, 0
  %567 = vmatprep.subr.bf16.mxu0 0
  %568 = vmatpush1.bf16.msra.mxu0 %v544
  %569 = vmatprep.subr.bf16.mxu0 0
  %570 = vmatpush1.bf16.msra.mxu0 %v545
  %571 = vmatprep.subr.bf16.mxu0 0
  %572 = vmatpush1.bf16.msra.mxu0 0
  %573 = vmatprep.subr.bf16.mxu0 0
  %574 = vmatpush1.bf16.msra.mxu0 0
  %575 = vmatprep.subr.bf16.mxu0 0
  %576 = vmatpush1.bf16.msra.mxu0 0
  %577 = vmatprep.subr.bf16.mxu0 0
  %578 = vmatpush1.bf16.msra.mxu0 0
  %579 = vmatprep.subr.bf16.mxu0 0
  %580 = vmatpush1.bf16.msra.mxu0 0
  %581 = vmatprep.subr.bf16.mxu0 0
  %582 = vmatpush1.bf16.msra.mxu0 0
  %583 = vmatprep.subr.bf16.mxu0 0
  %584 = vmatpush1.bf16.msra.mxu0 0
  %585 = vmatprep.subr.bf16.mxu0 0
  %586 = vmatpush1.bf16.msra.mxu0 0
  %587 = vmatprep.subr.bf16.mxu0 0
  %588 = vmatpush1.bf16.msra.mxu0 0
  %589 = vmatprep.subr.bf16.mxu0 0
  %590 = vmatpush1.bf16.msra.mxu0 0
  %591 = vmatprep.subr.bf16.mxu0 0
  %592 = vmatpush1.bf16.msra.mxu0 0
  %593 = vmatprep.subr.bf16.mxu0 0
  %594 = vmatpush1.bf16.msra.mxu0 0
  %595 = vmatprep.subr.bf16.mxu0 0
  %596 = vmatpush1.bf16.msra.mxu0 0
  %597 = vmatprep.subr.bf16.mxu0 0
  %598 = vmatpush1.bf16.msra.mxu0 0
  %599 = vmatprep.mubr.bf16.mxu0 0
  %600 = vmatmul.mubr.bf16.gmra.mrb[0].mxu0 %v562
  %v601 = vpop.f32.mrb[0].mxu0
  %v602 = vadd.f32 0.0, %v601
  %v603 = vpop.f32.mrb[0].mxu0
  %v604 = vpop.f32.mrb[0].mxu0
  %v605 = vpop.f32.mrb[0].mxu0
  %606 = vmatprep.mubr.bf16.mxu0 0
  %607 = vmatmul.mubr.bf16.gmra.mrb[0].mxu0 %v565
  %v608 = vpop.f32.mrb[0].mxu0
  %v609 = vpop.f32.mrb[0].mxu0
  %v610 = vpop.f32.mrb[0].mxu0
  %v611 = vpop.f32.mrb[0].mxu0
  %612 = vdwg.mxu0
  %v614 = vrot.slane %v602, 1
  %v616 = vsub.f32 %v602, %v614
  %v617 = vmul.f32 %v616, 1.442695
  %v618 = vpow.pop %v617
  %v619 = vadd.f32 %v618, 1.0
  %v620 = vrcp.pop %v619
  %v621 = vmul.f32 1.0, %v620
  %v622 = vsub.f32 1.0, %v621
  %623 = vst [vmem:[%s4] sm:$0x1] %v622
  %624 = vst [vmem:[%s4 + $0x1] sm:$0x1] %v621
  // Predicated region
  $region18: #{nn_forward.1} parent=0 // pred_check
    _
  $region19: #{nn_forward.1} parent=0 // pred_check_branch
    %626 = sbr.rel (0) target = $region21
  $region20: #{nn_forward.1} parent=0 // pred_region
    _
  $region21: #{nn_forward.1} parent=0 // pred_fallthru
    _
  // Predicated region
  $region22: #{nn_forward.1} parent=0 // pred_check
    _
  $region23: #{nn_forward.1} parent=0 // pred_check_branch
    %628 = sbr.rel (0) target = $region25
  $region24: #{nn_forward.1} parent=0 // pred_region
    _
  $region25: #{nn_forward.1} parent=0 // pred_fallthru
    _

</llo_original>
